<compile_context>
chip_gen: v6e
topology: v6e:2x2x1
jax: 0.10.0
libtpu: 0.0.40
codegen_flags: <defaults>
</compile_context>

<pallas_src>
import jax
import jax.numpy as jnp
from jax.experimental import pallas as pl
from jax.experimental.pallas import tpu as pltpu


def _ppo_mlp_kernel(x_ref, wh_ref, bh_ref, whead_ref, bhead_ref, out_ref):
    # Input ReLU is part of the module spec (flatten -> relu -> hidden).
    # ReLU in f32 on the VPU, then cast to bf16 for the MXU.
    x = jnp.maximum(x_ref[...], 0.0).astype(jnp.bfloat16)
    # hidden linear (bf16 x bf16 -> f32 accumulate) + bias + ReLU
    h = jnp.dot(x, wh_ref[...], preferred_element_type=jnp.float32) + bh_ref[...]
    h = jnp.maximum(h, 0.0).astype(jnp.bfloat16)
    # fused [logits | value | zero-pad] head: single lane-dense (tm, 128) store
    out_ref[...] = (
        jnp.dot(h, whead_ref[...], preferred_element_type=jnp.float32)
        + bhead_ref[...]
    )


def prepare_params(params):
    """Fuse the two heads, zero-pad to a 128-lane multiple, cast to bf16."""
    wh, bh, wl, bl, wv, bv = params
    O = wl.shape[1]
    whead = jnp.concatenate([wl, wv], axis=1)      # (H, O+1)
    bhead = jnp.concatenate([bl, bv], axis=1)      # (1, O+1)
    nh = max(128, ((O + 1 + 127) // 128) * 128)    # lane-dense head width
    pad = nh - (O + 1)
    whead = jnp.pad(whead, ((0, 0), (0, pad)))
    bhead = jnp.pad(bhead, ((0, 0), (0, pad)))
    return (
        wh.astype(jnp.bfloat16),
        bh.astype(jnp.float32),
        whead.astype(jnp.bfloat16),
        bhead.astype(jnp.float32),
        O,
    )


def ppo_mlp_forward(x, prepared):
    """x: any shape (B, ...). Returns (logits (B, O), value (B, 1))."""
    wh, bh, whead, bhead, O = prepared
    B = x.shape[0]
    x_flat = x.reshape(B, -1)                      # stays f32; cast in-kernel
    if x_flat.dtype != jnp.float32:
        x_flat = x_flat.astype(jnp.float32)
    D = x_flat.shape[1]
    H = wh.shape[1]
    NH = whead.shape[1]                            # padded head width (x128)

    # Resident weight footprint (bf16 weights, bias rows padded to 8 sublanes).
    weight_bytes = D * H * 2 + 8 * H * 4 + H * NH * 2 + 8 * NH * 4

    # Batch tile size.
    if B <= 128:
        tm = max(8, ((B + 7) // 8) * 8)
    else:
        # 256 fills the 256-wide MXU on v6e/v7x; only use it when there are
        # enough tiles to keep both v7x TensorCores busy.  128 is right for
        # v5e's 128-wide MXU and small grids.
        tm = 256 if B >= 1024 else 128
        # Keep double-buffered x/out tiles + resident weights within ~48 MiB
        # (v7x per-core budget with headroom) by shrinking tm if needed.
        while tm > 8 and 2 * (tm * (D + NH) * 4 + weight_bytes) > (48 << 20):
            tm //= 2

    tile_bytes = tm * D * 4 + tm * NH * 4
    need = 2 * (tile_bytes + weight_bytes) + (2 << 20)
    vmem_limit = int(min(max(need, 32 << 20), 64 << 20))

    cost = pl.CostEstimate(
        flops=2 * B * D * H + 2 * B * H * NH,
        transcendentals=0,
        bytes_accessed=(B * D * 4 + D * H * 2 + H * NH * 2
                        + B * NH * 4 + (H + NH) * 4),
    )

    out = pl.pallas_call(
        _ppo_mlp_kernel,
        out_shape=jax.ShapeDtypeStruct((B, NH), jnp.float32),
        grid=(pl.cdiv(B, tm),),
        in_specs=[
            pl.BlockSpec((tm, D), lambda i: (i, 0)),    # x tile (pipelined)
            pl.BlockSpec((D, H), lambda i: (0, 0)),     # Wh (resident)
            pl.BlockSpec((1, H), lambda i: (0, 0)),     # bh (resident)
            pl.BlockSpec((H, NH), lambda i: (0, 0)),    # fused head W (resident)
            pl.BlockSpec((1, NH), lambda i: (0, 0)),    # fused head b (resident)
        ],
        out_specs=pl.BlockSpec((tm, NH), lambda i: (i, 0)),
        compiler_params=pltpu.CompilerParams(
            dimension_semantics=("parallel",),
            vmem_limit_bytes=vmem_limit,
        ),
        cost_estimate=cost,
    )(x_flat, wh, bh, whead, bhead)

    logits = out[:, :O]
    value = out[:, O:O + 1]
    return logits, value


def init_params(key, in_features, hidden_size=256, output_size=15):
    """Deterministic parameter init matching the PyTorch module's shapes.

    hidden: LazyLinear(in_features -> hidden), torch-default-ish uniform init
    logits: Linear(hidden -> output_size), orthogonal(gain=0.01) weight, zero bias
    value : Linear(hidden -> 1), torch-default-ish uniform init
    Weights are stored (in, out).
    """
    k1, k2, k3, k4, k5 = jax.random.split(key, 5)

    bound_h = 1.0 / jnp.sqrt(in_features)
    wh = jax.random.uniform(k1, (in_features, hidden_size), jnp.float32,
                            -bound_h, bound_h)
    bh = jax.random.uniform(k2, (1, hidden_size), jnp.float32,
                            -bound_h, bound_h)

    # logits layer: orthogonal init with gain 0.01, zero bias
    a = jax.random.normal(k3, (hidden_size, output_size), jnp.float32)
    q, r = jnp.linalg.qr(a)                      # q: (hidden, output)
    d = jnp.diag(r)
    q = q * jnp.where(d >= 0, 1.0, -1.0)         # sign fix like torch orthogonal_
    wl = 0.01 * q
    bl = jnp.zeros((1, output_size), jnp.float32)

    bound_v = 1.0 / jnp.sqrt(hidden_size)
    wv = jax.random.uniform(k4, (hidden_size, 1), jnp.float32, -bound_v, bound_v)
    bv = jax.random.uniform(k5, (1, 1), jnp.float32, -bound_v, bound_v)

    return (wh, bh, wl, bl, wv, bv)


if __name__ == "__main__":
    key = jax.random.PRNGKey(0)
    kx, kp = jax.random.split(key)

    # Small input consistent with the module: NCHW image, flattened inside.
    B, C, Hs, Ws = 2, 4, 16, 16
    hidden_size, output_size = 256, 15
    x = jax.random.normal(kx, (B, C, Hs, Ws), jnp.float32)

    params = init_params(kp, in_features=C * Hs * Ws,
                         hidden_size=hidden_size, output_size=output_size)
    prepared = prepare_params(params)

    logits, value = ppo_mlp_forward(x, prepared)
    jax.block_until_ready((logits, value))

    assert logits.shape == (B, output_size)
    assert value.shape == (B, 1)

    wh, bh, wl, bl, wv, bv = params
    xf = jnp.maximum(x.reshape(B, -1), 0.0)

    # (a) bf16-matched reference: mirrors the kernel's math exactly.
    xbf = xf.astype(jnp.bfloat16)
    h_bf = jnp.dot(xbf, wh.astype(jnp.bfloat16),
                   preferred_element_type=jnp.float32) + bh
    h_bf = jnp.maximum(h_bf, 0.0).astype(jnp.bfloat16)
    logits_bf = jnp.dot(h_bf, wl.astype(jnp.bfloat16),
                        preferred_element_type=jnp.float32) + bl
    value_bf = jnp.dot(h_bf, wv.astype(jnp.bfloat16),
                       preferred_element_type=jnp.float32) + bv
    assert jnp.allclose(logits, logits_bf, atol=2e-3, rtol=2e-3)
    assert jnp.allclose(value, value_bf, atol=2e-3, rtol=2e-3)

    # (b) full-f32 reference (true PyTorch-module numerics); looser tolerance
    #     accounts for the kernel's bf16 inputs / weights.
    h32 = jnp.maximum(jnp.dot(xf, wh, preferred_element_type=jnp.float32) + bh, 0.0)
    logits32 = jnp.dot(h32, wl, preferred_element_type=jnp.float32) + bl
    value32 = jnp.dot(h32, wv, preferred_element_type=jnp.float32) + bv
    assert jnp.allclose(logits, logits32, atol=5e-2, rtol=5e-2)
    assert jnp.allclose(value, value32, atol=5e-2, rtol=5e-2)

    print("KERNEL_OK")
</pallas_src>

<mosaic_0001>
module attributes {stable_mosaic.version = 11 : i64} {
  func.func @_ppo_mlp_kernel(%arg0: i32, %arg1: memref<8x1024xf32, #tpu.memory_space<vmem>>, %arg2: memref<1024x256xbf16, #tpu.memory_space<vmem>>, %arg3: memref<1x256xf32, #tpu.memory_space<vmem>>, %arg4: memref<256x128xbf16, #tpu.memory_space<vmem>>, %arg5: memref<1x128xf32, #tpu.memory_space<vmem>>, %arg6: memref<8x128xf32, #tpu.memory_space<vmem>>) attributes {dimension_semantics = [#tpu.dimension_semantics<parallel>], iteration_bounds = array<i64: 1>, scalar_prefetch = 0 : i64, scratch_operands = 0 : i64, tpu.core_type = #tpu.core_type<tc>, window_params = [{transform_indices = @transform_0, window_bounds = array<i64: 8, 1024>}, {pipeline_mode = #tpu.pipeline_mode<synchronous>, transform_indices = @transform_1, window_bounds = array<i64: 1024, 256>}, {pipeline_mode = #tpu.pipeline_mode<synchronous>, transform_indices = @transform_2, window_bounds = array<i64: 1, 256>}, {pipeline_mode = #tpu.pipeline_mode<synchronous>, transform_indices = @transform_3, window_bounds = array<i64: 256, 128>}, {pipeline_mode = #tpu.pipeline_mode<synchronous>, transform_indices = @transform_4, window_bounds = array<i64: 1, 128>}, {transform_indices = @transform_5, window_bounds = array<i64: 8, 128>}]} {
    %c0 = arith.constant 0 : index
    %c0_0 = arith.constant 0 : index
    %0 = vector.load %arg1[%c0, %c0_0] : memref<8x1024xf32, #tpu.memory_space<vmem>>, vector<8x1024xf32>
    %cst = arith.constant 0.000000e+00 : f32
    %1 = vector.broadcast %cst : f32 to vector<8x1024xf32>
    %2 = arith.maximumf %0, %1 : vector<8x1024xf32>
    %3 = arith.truncf %2 : vector<8x1024xf32> to vector<8x1024xbf16>
    %c0_1 = arith.constant 0 : index
    %c0_2 = arith.constant 0 : index
    %4 = vector.load %arg2[%c0_1, %c0_2] : memref<1024x256xbf16, #tpu.memory_space<vmem>>, vector<1024x256xbf16>
    %cst_3 = arith.constant dense<0.000000e+00> : vector<8x256xf32>
    %5 = tpu.matmul %3, %4, %cst_3 {dimension_numbers = #tpu.dot_dimension_numbers<[1], [0], [0], [1], [0, 0, 1, 1], [], []>} : vector<8x1024xbf16>, vector<1024x256xbf16>, vector<8x256xf32> -> vector<8x256xf32>
    %c0_4 = arith.constant 0 : index
    %c0_5 = arith.constant 0 : index
    %6 = vector.load %arg3[%c0_4, %c0_5] : memref<1x256xf32, #tpu.memory_space<vmem>>, vector<1x256xf32>
    %7 = vector.broadcast %6 : vector<1x256xf32> to vector<8x256xf32>
    %8 = arith.addf %5, %7 : vector<8x256xf32>
    %cst_6 = arith.constant 0.000000e+00 : f32
    %9 = vector.broadcast %cst_6 : f32 to vector<8x256xf32>
    %10 = arith.maximumf %8, %9 : vector<8x256xf32>
    %11 = arith.truncf %10 : vector<8x256xf32> to vector<8x256xbf16>
    %c0_7 = arith.constant 0 : index
    %c0_8 = arith.constant 0 : index
    %12 = vector.load %arg4[%c0_7, %c0_8] : memref<256x128xbf16, #tpu.memory_space<vmem>>, vector<256x128xbf16>
    %cst_9 = arith.constant dense<0.000000e+00> : vector<8x128xf32>
    %13 = tpu.matmul %11, %12, %cst_9 {dimension_numbers = #tpu.dot_dimension_numbers<[1], [0], [0], [1], [0, 0, 1, 1], [], []>} : vector<8x256xbf16>, vector<256x128xbf16>, vector<8x128xf32> -> vector<8x128xf32>
    %c0_10 = arith.constant 0 : index
    %c0_11 = arith.constant 0 : index
    %14 = vector.load %arg5[%c0_10, %c0_11] : memref<1x128xf32, #tpu.memory_space<vmem>>, vector<1x128xf32>
    %15 = vector.broadcast %14 : vector<1x128xf32> to vector<8x128xf32>
    %16 = arith.addf %13, %15 : vector<8x128xf32>
    %c0_12 = arith.constant 0 : index
    %c0_13 = arith.constant 0 : index
    %17 = vector.load %arg6[%c0_12, %c0_13] : memref<8x128xf32, #tpu.memory_space<vmem>>, vector<8x128xf32>
    tpu.vector_store %arg6[%c0_12, %c0_13], %16 {strides = array<i32>} : memref<8x128xf32, #tpu.memory_space<vmem>>, vector<8x128xf32>,
    return
  }
  func.func @transform_0(%arg0: i32) -> (i32, i32) {
    %c0_i32 = arith.constant 0 : i32
    %c0_i32_0 = arith.constant 0 : i32
    return %arg0, %c0_i32 : i32, i32
  }
  func.func @transform_1(%arg0: i32) -> (i32, i32) {
    %c0_i32 = arith.constant 0 : i32
    %c0_i32_0 = arith.constant 0 : i32
    %c0_i32_1 = arith.constant 0 : i32
    return %c0_i32, %c0_i32_0 : i32, i32
  }
  func.func @transform_2(%arg0: i32) -> (i32, i32) {
    %c0_i32 = arith.constant 0 : i32
    %c0_i32_0 = arith.constant 0 : i32
    %c0_i32_1 = arith.constant 0 : i32
    return %c0_i32, %c0_i32_0 : i32, i32
  }
  func.func @transform_3(%arg0: i32) -> (i32, i32) {
    %c0_i32 = arith.constant 0 : i32
    %c0_i32_0 = arith.constant 0 : i32
    %c0_i32_1 = arith.constant 0 : i32
    return %c0_i32, %c0_i32_0 : i32, i32
  }
  func.func @transform_4(%arg0: i32) -> (i32, i32) {
    %c0_i32 = arith.constant 0 : i32
    %c0_i32_0 = arith.constant 0 : i32
    %c0_i32_1 = arith.constant 0 : i32
    return %c0_i32, %c0_i32_0 : i32, i32
  }
  func.func @transform_5(%arg0: i32) -> (i32, i32) {
    %c0_i32 = arith.constant 0 : i32
    %c0_i32_0 = arith.constant 0 : i32
    return %arg0, %c0_i32 : i32, i32
  }
}

</mosaic_0001>

<llo_original>
// kernel: tpu_custom_call.1
$region0: #{tpu_custom_call.1}
  #allocation0 [shape = 'u32[]', space=smem, size = 0x4, offset = 0x4, fixed_abs, tag = 'smem constant byte address 0x4 - core index']
  #allocation1 [shape = 'u32[144,128]{1,0:T(1,128)}', space=vmem, size = 0x12000, scoped, tag = 'internal scratch']
  %s0 = inlined_call_operand.hbm [shape: f32[2,1024], index: 0, kind: input, shape index: {}]
  %s1 = inlined_call_operand.hbm [shape: bf16[1024,256], index: 1, kind: input, shape index: {}]
  %s2 = inlined_call_operand.vmem [shape: f32[1,256], index: 2, kind: input, shape index: {}]
  %s3 = inlined_call_operand.hbm [shape: bf16[256,128], index: 3, kind: input, shape index: {}]
  %s4 = inlined_call_operand.vmem [shape: f32[1,128], index: 4, kind: input, shape index: {}]
  %s5 = inlined_call_operand.hbm [shape: f32[2,128], index: 5, kind: output, shape index: {}]
  %s6 = sld [smem:[#allocation0]]
  $region42: #{tpu_custom_call.1} parent=0
    _
  %s8 = ssub.s32 1, %s6
  %s9 = scalar_select 0, %s8, %s6
  $region1: #{tpu_custom_call.1} parent=0
    #allocation2 [shape = 'u8[32768]{0}', space=vmem, size = 0x8000, scoped, tag = 'input window, operand 0, single buffered']
    #allocation3 [shape = 's32[1]{0}', space=sflag, size = 0x4, scoped, tag = 'scoped memory for tpu_custom_call.1']
    #allocation4 [shape = 's32[1]{0}', space=sflag, size = 0x4, scoped, tag = 'scoped memory for tpu_custom_call.1']
    #allocation5 [shape = 'u8[524288]{0}', space=vmem, size = 0x80000, scoped, tag = 'input window, operand 1, single buffered']
    #allocation6 [shape = 's32[1]{0}', space=sflag, size = 0x4, scoped, tag = 'scoped memory for tpu_custom_call.1']
    #allocation7 [shape = 'u8[65536]{0}', space=vmem, size = 0x10000, scoped, tag = 'input window, operand 3, single buffered']
    #allocation8 [shape = 'u8[4096]{0}', space=vmem, size = 0x1000, scoped, tag = 'output window, operand 0, single buffered']
    %10 = vsyncpa [#allocation3], 0
    %11 = vsyncpa [#allocation6], 0
    %12 = vsyncpa [#allocation4], 0
    // Predicated region
    $region2: #{tpu_custom_call.1} parent=1 // pred_check
      _
    $region3: #{tpu_custom_call.1} parent=1 // pred_check_branch
      %14 = sbr.rel (0) target = $region5
    $region4: #{tpu_custom_call.1} parent=1 // pred_region
      %s16 = ssub.s32 1024, 256
      %17 = vsyncadd [#allocation3], %s16
      %s18 = sshll.u32 [#allocation2], 4
      %s19 = int_to_ptr.vmem [resolvable:$true] %s18
      %24 = dma.hbm_to_vmem [thread:$0]  %s0, 256, %s19, [#allocation3], 256, 256, 16
    $region5: #{tpu_custom_call.1} parent=1 // pred_fallthru
      _
    // Predicated region
    $region6: #{tpu_custom_call.1} parent=1 // pred_check
      _
    $region7: #{tpu_custom_call.1} parent=1 // pred_check_branch
      %26 = sbr.rel (0) target = $region9
    $region8: #{tpu_custom_call.1} parent=1 // pred_region
      %s28 = ssub.s32 16384, 16384
      %29 = vsyncadd [#allocation6], %s28
      %s30 = sshll.u32 [#allocation5], 4
      %s31 = int_to_ptr.vmem [resolvable:$true] %s30
      %36 = dma.hbm_to_vmem [thread:$0]  %s1, 16384, %s31, [#allocation6], 128, 128, 8
    $region9: #{tpu_custom_call.1} parent=1 // pred_fallthru
      _
    // Predicated region
    $region10: #{tpu_custom_call.1} parent=1 // pred_check
      _
    $region11: #{tpu_custom_call.1} parent=1 // pred_check_branch
      %38 = sbr.rel (0) target = $region13
    $region12: #{tpu_custom_call.1} parent=1 // pred_region
      _
    $region13: #{tpu_custom_call.1} parent=1 // pred_fallthru
      _
    // Predicated region
    $region14: #{tpu_custom_call.1} parent=1 // pred_check
      _
    $region15: #{tpu_custom_call.1} parent=1 // pred_check_branch
      %40 = sbr.rel (0) target = $region17
    $region16: #{tpu_custom_call.1} parent=1 // pred_region
      %s42 = ssub.s32 2048, 2048
      %43 = vsyncadd [#allocation6], %s42
      %s44 = sshll.u32 [#allocation7], 4
      %s45 = int_to_ptr.vmem [resolvable:$true] %s44
      %50 = dma.hbm_to_vmem [thread:$0]  %s3, 2048, %s45, [#allocation6], 64, 64, 4
    $region17: #{tpu_custom_call.1} parent=1 // pred_fallthru
      _
    // Predicated region
    $region18: #{tpu_custom_call.1} parent=1 // pred_check
      _
    $region19: #{tpu_custom_call.1} parent=1 // pred_check_branch
      %52 = sbr.rel (0) target = $region21
    $region20: #{tpu_custom_call.1} parent=1 // pred_region
      _
    $region21: #{tpu_custom_call.1} parent=1 // pred_fallthru
      _
    // Predicated region
    $region22: #{tpu_custom_call.1} parent=1 // pred_check
      _
    $region23: #{tpu_custom_call.1} parent=1 // pred_check_branch
      %54 = sbr.rel (0) target = $region25
    $region24: #{tpu_custom_call.1} parent=1 // pred_region
      %55 = dma.done [#allocation3], 1024
    $region25: #{tpu_custom_call.1} parent=1 // pred_fallthru
      _
    // Predicated region
    $region26: #{tpu_custom_call.1} parent=1 // pred_check
      _
    $region27: #{tpu_custom_call.1} parent=1 // pred_check_branch
      %57 = sbr.rel (0) target = $region29
    $region28: #{tpu_custom_call.1} parent=1 // pred_region
      %58 = dma.done [#allocation6], 16384
    $region29: #{tpu_custom_call.1} parent=1 // pred_fallthru
      _
    // Predicated region
    $region30: #{tpu_custom_call.1} parent=1 // pred_check
      _
    $region31: #{tpu_custom_call.1} parent=1 // pred_check_branch
      %60 = sbr.rel (0) target = $region33
    $region32: #{tpu_custom_call.1} parent=1 // pred_region
      %61 = dma.done [#allocation6], 2048
    $region33: #{tpu_custom_call.1} parent=1 // pred_fallthru
      _
    %v63 = vld [vmem:[#allocation2] sm:$0xff]
    %v64 = vld [vmem:[#allocation2 + $0x8] sm:$0xff]
    %v65 = vld [vmem:[#allocation2 + $0x10] sm:$0xff]
    %v66 = vld [vmem:[#allocation2 + $0x18] sm:$0xff]
    %v67 = vld [vmem:[#allocation2 + $0x20] sm:$0xff]
    %v68 = vld [vmem:[#allocation2 + $0x28] sm:$0xff]
    %v69 = vld [vmem:[#allocation2 + $0x30] sm:$0xff]
    %v70 = vld [vmem:[#allocation2 + $0x38] sm:$0xff]
    %v71 = vmax.f32 %v63, 0.0
    %v72 = vmax.f32 %v64, 0.0
    %v73 = vmax.f32 %v65, 0.0
    %v74 = vmax.f32 %v66, 0.0
    %v75 = vmax.f32 %v67, 0.0
    %v76 = vmax.f32 %v68, 0.0
    %v77 = vmax.f32 %v69, 0.0
    %v78 = vmax.f32 %v70, 0.0
    %v87 = vcombine.low %v71, %v73
    %v88 = vcombine.high %v71, %v73
    %v89 = vcombine.low %v75, %v77
    %v90 = vcombine.high %v75, %v77
    %v92 = vunpack.c.l.s4 1983009808
    %v93 = vunpack.c.0.s8 %v92
    %v94 = vlaneseq
    %v95 = vshrl.u32 %v94, 7
    %v96 = vsub.s32 %v93, %v95
    %v97 = vrot.slane %v87, %v96
    %v99 = vunpack.c.l.s4 1983009808
    %v100 = vunpack.c.0.s8 %v99
    %v101 = vlaneseq
    %v102 = vshrl.u32 %v101, 7
    %v103 = vsub.s32 %v100, %v102
    %v104 = vrot.slane %v88, %v103
    %v106 = vunpack.c.l.s4 1983009808
    %v107 = vunpack.c.0.s8 %v106
    %v108 = vlaneseq
    %v109 = vshrl.u32 %v108, 7
    %v110 = vsub.s32 %v107, %v109
    %v111 = vrot.slane %v89, %v110
    %v113 = vunpack.c.l.s4 1983009808
    %v114 = vunpack.c.0.s8 %v113
    %v115 = vlaneseq
    %v116 = vshrl.u32 %v115, 7
    %v117 = vsub.s32 %v114, %v116
    %v118 = vrot.slane %v90, %v117
    %v119 = vcombine.low %v97, %v111
    %v120 = vcombine.high %v97, %v111
    %v121 = vcombine.low %v104, %v118
    %v122 = vcombine.high %v104, %v118
    %v123 = vcombine.low %v72, %v74
    %v124 = vcombine.high %v72, %v74
    %v125 = vcombine.low %v76, %v78
    %v126 = vcombine.high %v76, %v78
    %v128 = vunpack.c.l.s4 1983009808
    %v129 = vunpack.c.0.s8 %v128
    %v130 = vlaneseq
    %v131 = vshrl.u32 %v130, 7
    %v132 = vsub.s32 %v129, %v131
    %v133 = vrot.slane %v123, %v132
    %v135 = vunpack.c.l.s4 1983009808
    %v136 = vunpack.c.0.s8 %v135
    %v137 = vlaneseq
    %v138 = vshrl.u32 %v137, 7
    %v139 = vsub.s32 %v136, %v138
    %v140 = vrot.slane %v124, %v139
    %v142 = vunpack.c.l.s4 1983009808
    %v143 = vunpack.c.0.s8 %v142
    %v144 = vlaneseq
    %v145 = vshrl.u32 %v144, 7
    %v146 = vsub.s32 %v143, %v145
    %v147 = vrot.slane %v125, %v146
    %v149 = vunpack.c.l.s4 1983009808
    %v150 = vunpack.c.0.s8 %v149
    %v151 = vlaneseq
    %v152 = vshrl.u32 %v151, 7
    %v153 = vsub.s32 %v150, %v152
    %v154 = vrot.slane %v126, %v153
    %v155 = vcombine.low %v133, %v147
    %v156 = vcombine.high %v133, %v147
    %v157 = vcombine.low %v140, %v154
    %v158 = vcombine.high %v140, %v154
    %v167 = vpack.c.bf16 %v119, %v119
    %v168 = vpack.c.bf16 %v120, %v120
    %v169 = vpack.c.bf16 %v121, %v121
    %v170 = vpack.c.bf16 %v122, %v122
    %v171 = vpack.c.bf16 %v155, %v155
    %v172 = vpack.c.bf16 %v156, %v156
    %v173 = vpack.c.bf16 %v157, %v157
    %v174 = vpack.c.bf16 %v158, %v158
    %v175 = vld [vmem:[#allocation5] sm:$0xff]
    %v176 = vld [vmem:[#allocation5 + $0x8] sm:$0xff]
    %v177 = vld [vmem:[#allocation5 + $0x10] sm:$0xff]
    %v178 = vld [vmem:[#allocation5 + $0x18] sm:$0xff]
    %v179 = vld [vmem:[#allocation5 + $0x20] sm:$0xff]
    %v180 = vld [vmem:[#allocation5 + $0x28] sm:$0xff]
    %v181 = vld [vmem:[#allocation5 + $0x30] sm:$0xff]
    %v182 = vld [vmem:[#allocation5 + $0x38] sm:$0xff]
    %v183 = vld [vmem:[#allocation5 + $0x40] sm:$0xff]
    %v184 = vld [vmem:[#allocation5 + $0x48] sm:$0xff]
    %v185 = vld [vmem:[#allocation5 + $0x50] sm:$0xff]
    %v186 = vld [vmem:[#allocation5 + $0x58] sm:$0xff]
    %v187 = vld [vmem:[#allocation5 + $0x60] sm:$0xff]
    %v188 = vld [vmem:[#allocation5 + $0x68] sm:$0xff]
    %v189 = vld [vmem:[#allocation5 + $0x70] sm:$0xff]
    %v190 = vld [vmem:[#allocation5 + $0x78] sm:$0xff]
    %v191 = vld [vmem:[#allocation5 + $0x80] sm:$0xff]
    %v192 = vld [vmem:[#allocation5 + $0x88] sm:$0xff]
    %v193 = vld [vmem:[#allocation5 + $0x90] sm:$0xff]
    %v194 = vld [vmem:[#allocation5 + $0x98] sm:$0xff]
    %v195 = vld [vmem:[#allocation5 + $0xa0] sm:$0xff]
    %v196 = vld [vmem:[#allocation5 + $0xa8] sm:$0xff]
    %v197 = vld [vmem:[#allocation5 + $0xb0] sm:$0xff]
    %v198 = vld [vmem:[#allocation5 + $0xb8] sm:$0xff]
    %v199 = vld [vmem:[#allocation5 + $0xc0] sm:$0xff]
    %v200 = vld [vmem:[#allocation5 + $0xc8] sm:$0xff]
    %v201 = vld [vmem:[#allocation5 + $0xd0] sm:$0xff]
    %v202 = vld [vmem:[#allocation5 + $0xd8] sm:$0xff]
    %v203 = vld [vmem:[#allocation5 + $0xe0] sm:$0xff]
    %v204 = vld [vmem:[#allocation5 + $0xe8] sm:$0xff]
    %v205 = vld [vmem:[#allocation5 + $0xf0] sm:$0xff]
    %v206 = vld [vmem:[#allocation5 + $0xf8] sm:$0xff]
    %v207 = vld [vmem:[#allocation5 + $0x100] sm:$0xff]
    %v208 = vld [vmem:[#allocation5 + $0x108] sm:$0xff]
    %v209 = vld [vmem:[#allocation5 + $0x110] sm:$0xff]
    %v210 = vld [vmem:[#allocation5 + $0x118] sm:$0xff]
    %v211 = vld [vmem:[#allocation5 + $0x120] sm:$0xff]
    %v212 = vld [vmem:[#allocation5 + $0x128] sm:$0xff]
    %v213 = vld [vmem:[#allocation5 + $0x130] sm:$0xff]
    %v214 = vld [vmem:[#allocation5 + $0x138] sm:$0xff]
    %v215 = vld [vmem:[#allocation5 + $0x140] sm:$0xff]
    %v216 = vld [vmem:[#allocation5 + $0x148] sm:$0xff]
    %v217 = vld [vmem:[#allocation5 + $0x150] sm:$0xff]
    %v218 = vld [vmem:[#allocation5 + $0x158] sm:$0xff]
    %v219 = vld [vmem:[#allocation5 + $0x160] sm:$0xff]
    %v220 = vld [vmem:[#allocation5 + $0x168] sm:$0xff]
    %v221 = vld [vmem:[#allocation5 + $0x170] sm:$0xff]
    %v222 = vld [vmem:[#allocation5 + $0x178] sm:$0xff]
    %v223 = vld [vmem:[#allocation5 + $0x180] sm:$0xff]
    %v224 = vld [vmem:[#allocation5 + $0x188] sm:$0xff]
    %v225 = vld [vmem:[#allocation5 + $0x190] sm:$0xff]
    %v226 = vld [vmem:[#allocation5 + $0x198] sm:$0xff]
    %v227 = vld [vmem:[#allocation5 + $0x1a0] sm:$0xff]
    %v228 = vld [vmem:[#allocation5 + $0x1a8] sm:$0xff]
    %v229 = vld [vmem:[#allocation5 + $0x1b0] sm:$0xff]
    %v230 = vld [vmem:[#allocation5 + $0x1b8] sm:$0xff]
    %v231 = vld [vmem:[#allocation5 + $0x1c0] sm:$0xff]
    %v232 = vld [vmem:[#allocation5 + $0x1c8] sm:$0xff]
    %v233 = vld [vmem:[#allocation5 + $0x1d0] sm:$0xff]
    %v234 = vld [vmem:[#allocation5 + $0x1d8] sm:$0xff]
    %v235 = vld [vmem:[#allocation5 + $0x1e0] sm:$0xff]
    %v236 = vld [vmem:[#allocation5 + $0x1e8] sm:$0xff]
    %v237 = vld [vmem:[#allocation5 + $0x1f0] sm:$0xff]
    %v238 = vld [vmem:[#allocation5 + $0x1f8] sm:$0xff]
    %v239 = vld [vmem:[#allocation5 + $0x200] sm:$0xff]
    %v240 = vld [vmem:[#allocation5 + $0x208] sm:$0xff]
    %v241 = vld [vmem:[#allocation5 + $0x210] sm:$0xff]
    %v242 = vld [vmem:[#allocation5 + $0x218] sm:$0xff]
    %v243 = vld [vmem:[#allocation5 + $0x220] sm:$0xff]
    %v244 = vld [vmem:[#allocation5 + $0x228] sm:$0xff]
    %v245 = vld [vmem:[#allocation5 + $0x230] sm:$0xff]
    %v246 = vld [vmem:[#allocation5 + $0x238] sm:$0xff]
    %v247 = vld [vmem:[#allocation5 + $0x240] sm:$0xff]
    %v248 = vld [vmem:[#allocation5 + $0x248] sm:$0xff]
    %v249 = vld [vmem:[#allocation5 + $0x250] sm:$0xff]
    %v250 = vld [vmem:[#allocation5 + $0x258] sm:$0xff]
    %v251 = vld [vmem:[#allocation5 + $0x260] sm:$0xff]
    %v252 = vld [vmem:[#allocation5 + $0x268] sm:$0xff]
    %v253 = vld [vmem:[#allocation5 + $0x270] sm:$0xff]
    %v254 = vld [vmem:[#allocation5 + $0x278] sm:$0xff]
    %v255 = vld [vmem:[#allocation5 + $0x280] sm:$0xff]
    %v256 = vld [vmem:[#allocation5 + $0x288] sm:$0xff]
    %v257 = vld [vmem:[#allocation5 + $0x290] sm:$0xff]
    %v258 = vld [vmem:[#allocation5 + $0x298] sm:$0xff]
    %v259 = vld [vmem:[#allocation5 + $0x2a0] sm:$0xff]
    %v260 = vld [vmem:[#allocation5 + $0x2a8] sm:$0xff]
    %v261 = vld [vmem:[#allocation5 + $0x2b0] sm:$0xff]
    %v262 = vld [vmem:[#allocation5 + $0x2b8] sm:$0xff]
    %v263 = vld [vmem:[#allocation5 + $0x2c0] sm:$0xff]
    %v264 = vld [vmem:[#allocation5 + $0x2c8] sm:$0xff]
    %v265 = vld [vmem:[#allocation5 + $0x2d0] sm:$0xff]
    %v266 = vld [vmem:[#allocation5 + $0x2d8] sm:$0xff]
    %v267 = vld [vmem:[#allocation5 + $0x2e0] sm:$0xff]
    %v268 = vld [vmem:[#allocation5 + $0x2e8] sm:$0xff]
    %v269 = vld [vmem:[#allocation5 + $0x2f0] sm:$0xff]
    %v270 = vld [vmem:[#allocation5 + $0x2f8] sm:$0xff]
    %v271 = vld [vmem:[#allocation5 + $0x300] sm:$0xff]
    %v272 = vld [vmem:[#allocation5 + $0x308] sm:$0xff]
    %v273 = vld [vmem:[#allocation5 + $0x310] sm:$0xff]
    %v274 = vld [vmem:[#allocation5 + $0x318] sm:$0xff]
    %v275 = vld [vmem:[#allocation5 + $0x320] sm:$0xff]
    %v276 = vld [vmem:[#allocation5 + $0x328] sm:$0xff]
    %v277 = vld [vmem:[#allocation5 + $0x330] sm:$0xff]
    %v278 = vld [vmem:[#allocation5 + $0x338] sm:$0xff]
    %v279 = vld [vmem:[#allocation5 + $0x340] sm:$0xff]
    %v280 = vld [vmem:[#allocation5 + $0x348] sm:$0xff]
    %v281 = vld [vmem:[#allocation5 + $0x350] sm:$0xff]
    %v282 = vld [vmem:[#allocation5 + $0x358] sm:$0xff]
    %v283 = vld [vmem:[#allocation5 + $0x360] sm:$0xff]
    %v284 = vld [vmem:[#allocation5 + $0x368] sm:$0xff]
    %v285 = vld [vmem:[#allocation5 + $0x370] sm:$0xff]
    %v286 = vld [vmem:[#allocation5 + $0x378] sm:$0xff]
    %v287 = vld [vmem:[#allocation5 + $0x380] sm:$0xff]
    %v288 = vld [vmem:[#allocation5 + $0x388] sm:$0xff]
    %v289 = vld [vmem:[#allocation5 + $0x390] sm:$0xff]
    %v290 = vld [vmem:[#allocation5 + $0x398] sm:$0xff]
    %v291 = vld [vmem:[#allocation5 + $0x3a0] sm:$0xff]
    %v292 = vld [vmem:[#allocation5 + $0x3a8] sm:$0xff]
    %v293 = vld [vmem:[#allocation5 + $0x3b0] sm:$0xff]
    %v294 = vld [vmem:[#allocation5 + $0x3b8] sm:$0xff]
    %v295 = vld [vmem:[#allocation5 + $0x3c0] sm:$0xff]
    %v296 = vld [vmem:[#allocation5 + $0x3c8] sm:$0xff]
    %v297 = vld [vmem:[#allocation5 + $0x3d0] sm:$0xff]
    %v298 = vld [vmem:[#allocation5 + $0x3d8] sm:$0xff]
    %v299 = vld [vmem:[#allocation5 + $0x3e0] sm:$0xff]
    %v300 = vld [vmem:[#allocation5 + $0x3e8] sm:$0xff]
    %v301 = vld [vmem:[#allocation5 + $0x3f0] sm:$0xff]
    %v302 = vld [vmem:[#allocation5 + $0x3f8] sm:$0xff]
    %v303 = vld [vmem:[%s2] sm:$0x3]
    %v305 = vlaneseq
    %v306 = vshrl.u32 %v305, 7
    %v307 = vsub.s32 0, %v306
    %v308 = vrot.slane %v303, %v307
    %v309 = vlaneseq
    %v310 = vshrl.u32 %v309, 7
    %v311 = vsub.s32 1, %v310
    %v312 = vrot.slane %v303, %v311
    %v443 = vunpack.c.l.b16 %v175
    %v444 = vunpack.c.h.b16 %v175
    %v445 = vunpack.c.l.b16 %v176
    %v446 = vunpack.c.h.b16 %v176
    %v447 = vunpack.c.l.b16 %v177
    %v448 = vunpack.c.h.b16 %v177
    %v449 = vunpack.c.l.b16 %v178
    %v450 = vunpack.c.h.b16 %v178
    %v451 = vunpack.c.l.b16 %v179
    %v452 = vunpack.c.h.b16 %v179
    %v453 = vunpack.c.l.b16 %v180
    %v454 = vunpack.c.h.b16 %v180
    %v455 = vunpack.c.l.b16 %v181
    %v456 = vunpack.c.h.b16 %v181
    %v457 = vunpack.c.l.b16 %v182
    %v458 = vunpack.c.h.b16 %v182
    %v459 = vunpack.c.l.b16 %v183
    %v460 = vunpack.c.h.b16 %v183
    %v461 = vunpack.c.l.b16 %v184
    %v462 = vunpack.c.h.b16 %v184
    %v463 = vunpack.c.l.b16 %v185
    %v464 = vunpack.c.h.b16 %v185
    %v465 = vunpack.c.l.b16 %v186
    %v466 = vunpack.c.h.b16 %v186
    %v467 = vunpack.c.l.b16 %v187
    %v468 = vunpack.c.h.b16 %v187
    %v469 = vunpack.c.l.b16 %v188
    %v470 = vunpack.c.h.b16 %v188
    %v471 = vunpack.c.l.b16 %v189
    %v472 = vunpack.c.h.b16 %v189
    %v473 = vunpack.c.l.b16 %v190
    %v474 = vunpack.c.h.b16 %v190
    %v475 = vunpack.c.l.b16 %v191
    %v476 = vunpack.c.h.b16 %v191
    %v477 = vunpack.c.l.b16 %v192
    %v478 = vunpack.c.h.b16 %v192
    %v479 = vunpack.c.l.b16 %v193
    %v480 = vunpack.c.h.b16 %v193
    %v481 = vunpack.c.l.b16 %v194
    %v482 = vunpack.c.h.b16 %v194
    %v483 = vunpack.c.l.b16 %v195
    %v484 = vunpack.c.h.b16 %v195
    %v485 = vunpack.c.l.b16 %v196
    %v486 = vunpack.c.h.b16 %v196
    %v487 = vunpack.c.l.b16 %v197
    %v488 = vunpack.c.h.b16 %v197
    %v489 = vunpack.c.l.b16 %v198
    %v490 = vunpack.c.h.b16 %v198
    %v491 = vunpack.c.l.b16 %v199
    %v492 = vunpack.c.h.b16 %v199
    %v493 = vunpack.c.l.b16 %v200
    %v494 = vunpack.c.h.b16 %v200
    %v495 = vunpack.c.l.b16 %v201
    %v496 = vunpack.c.h.b16 %v201
    %v497 = vunpack.c.l.b16 %v202
    %v498 = vunpack.c.h.b16 %v202
    %v499 = vunpack.c.l.b16 %v203
    %v500 = vunpack.c.h.b16 %v203
    %v501 = vunpack.c.l.b16 %v204
    %v502 = vunpack.c.h.b16 %v204
    %v503 = vunpack.c.l.b16 %v205
    %v504 = vunpack.c.h.b16 %v205
    %v505 = vunpack.c.l.b16 %v206
    %v506 = vunpack.c.h.b16 %v206
    %v507 = vunpack.c.l.b16 %v207
    %v508 = vunpack.c.h.b16 %v207
    %v509 = vunpack.c.l.b16 %v208
    %v510 = vunpack.c.h.b16 %v208
    %v511 = vunpack.c.l.b16 %v209
    %v512 = vunpack.c.h.b16 %v209
    %v513 = vunpack.c.l.b16 %v210
    %v514 = vunpack.c.h.b16 %v210
    %v515 = vunpack.c.l.b16 %v211
    %v516 = vunpack.c.h.b16 %v211
    %v517 = vunpack.c.l.b16 %v212
    %v518 = vunpack.c.h.b16 %v212
    %v519 = vunpack.c.l.b16 %v213
    %v520 = vunpack.c.h.b16 %v213
    %v521 = vunpack.c.l.b16 %v214
    %v522 = vunpack.c.h.b16 %v214
    %v523 = vunpack.c.l.b16 %v215
    %v524 = vunpack.c.h.b16 %v215
    %v525 = vunpack.c.l.b16 %v216
    %v526 = vunpack.c.h.b16 %v216
    %v527 = vunpack.c.l.b16 %v217
    %v528 = vunpack.c.h.b16 %v217
    %v529 = vunpack.c.l.b16 %v218
    %v530 = vunpack.c.h.b16 %v218
    %v531 = vunpack.c.l.b16 %v219
    %v532 = vunpack.c.h.b16 %v219
    %v533 = vunpack.c.l.b16 %v220
    %v534 = vunpack.c.h.b16 %v220
    %v535 = vunpack.c.l.b16 %v221
    %v536 = vunpack.c.h.b16 %v221
    %v537 = vunpack.c.l.b16 %v222
    %v538 = vunpack.c.h.b16 %v222
    %v539 = vunpack.c.l.b16 %v223
    %v540 = vunpack.c.h.b16 %v223
    %v541 = vunpack.c.l.b16 %v224
    %v542 = vunpack.c.h.b16 %v224
    %v543 = vunpack.c.l.b16 %v225
    %v544 = vunpack.c.h.b16 %v225
    %v545 = vunpack.c.l.b16 %v226
    %v546 = vunpack.c.h.b16 %v226
    %v547 = vunpack.c.l.b16 %v227
    %v548 = vunpack.c.h.b16 %v227
    %v549 = vunpack.c.l.b16 %v228
    %v550 = vunpack.c.h.b16 %v228
    %v551 = vunpack.c.l.b16 %v229
    %v552 = vunpack.c.h.b16 %v229
    %v553 = vunpack.c.l.b16 %v230
    %v554 = vunpack.c.h.b16 %v230
    %v555 = vunpack.c.l.b16 %v231
    %v556 = vunpack.c.h.b16 %v231
    %v557 = vunpack.c.l.b16 %v232
    %v558 = vunpack.c.h.b16 %v232
    %v559 = vunpack.c.l.b16 %v233
    %v560 = vunpack.c.h.b16 %v233
    %v561 = vunpack.c.l.b16 %v234
    %v562 = vunpack.c.h.b16 %v234
    %v563 = vunpack.c.l.b16 %v235
    %v564 = vunpack.c.h.b16 %v235
    %v565 = vunpack.c.l.b16 %v236
    %v566 = vunpack.c.h.b16 %v236
    %v567 = vunpack.c.l.b16 %v237
    %v568 = vunpack.c.h.b16 %v237
    %v569 = vunpack.c.l.b16 %v238
    %v570 = vunpack.c.h.b16 %v238
    %v571 = vunpack.c.l.b16 %v239
    %v572 = vunpack.c.h.b16 %v239
    %v573 = vunpack.c.l.b16 %v240
    %v574 = vunpack.c.h.b16 %v240
    %v575 = vunpack.c.l.b16 %v241
    %v576 = vunpack.c.h.b16 %v241
    %v577 = vunpack.c.l.b16 %v242
    %v578 = vunpack.c.h.b16 %v242
    %v579 = vunpack.c.l.b16 %v243
    %v580 = vunpack.c.h.b16 %v243
    %v581 = vunpack.c.l.b16 %v244
    %v582 = vunpack.c.h.b16 %v244
    %v583 = vunpack.c.l.b16 %v245
    %v584 = vunpack.c.h.b16 %v245
    %v585 = vunpack.c.l.b16 %v246
    %v586 = vunpack.c.h.b16 %v246
    %v587 = vunpack.c.l.b16 %v247
    %v588 = vunpack.c.h.b16 %v247
    %v589 = vunpack.c.l.b16 %v248
    %v590 = vunpack.c.h.b16 %v248
    %v591 = vunpack.c.l.b16 %v249
    %v592 = vunpack.c.h.b16 %v249
    %v593 = vunpack.c.l.b16 %v250
    %v594 = vunpack.c.h.b16 %v250
    %v595 = vunpack.c.l.b16 %v251
    %v596 = vunpack.c.h.b16 %v251
    %v597 = vunpack.c.l.b16 %v252
    %v598 = vunpack.c.h.b16 %v252
    %v599 = vunpack.c.l.b16 %v253
    %v600 = vunpack.c.h.b16 %v253
    %v601 = vunpack.c.l.b16 %v254
    %v602 = vunpack.c.h.b16 %v254
    %v603 = vunpack.c.l.b16 %v255
    %v604 = vunpack.c.h.b16 %v255
    %v605 = vunpack.c.l.b16 %v256
    %v606 = vunpack.c.h.b16 %v256
    %v607 = vunpack.c.l.b16 %v257
    %v608 = vunpack.c.h.b16 %v257
    %v609 = vunpack.c.l.b16 %v258
    %v610 = vunpack.c.h.b16 %v258
    %v611 = vunpack.c.l.b16 %v259
    %v612 = vunpack.c.h.b16 %v259
    %v613 = vunpack.c.l.b16 %v260
    %v614 = vunpack.c.h.b16 %v260
    %v615 = vunpack.c.l.b16 %v261
    %v616 = vunpack.c.h.b16 %v261
    %v617 = vunpack.c.l.b16 %v262
    %v618 = vunpack.c.h.b16 %v262
    %v619 = vunpack.c.l.b16 %v263
    %v620 = vunpack.c.h.b16 %v263
    %v621 = vunpack.c.l.b16 %v264
    %v622 = vunpack.c.h.b16 %v264
    %v623 = vunpack.c.l.b16 %v265
    %v624 = vunpack.c.h.b16 %v265
    %v625 = vunpack.c.l.b16 %v266
    %v626 = vunpack.c.h.b16 %v266
    %v627 = vunpack.c.l.b16 %v267
    %v628 = vunpack.c.h.b16 %v267
    %v629 = vunpack.c.l.b16 %v268
    %v630 = vunpack.c.h.b16 %v268
    %v631 = vunpack.c.l.b16 %v269
    %v632 = vunpack.c.h.b16 %v269
    %v633 = vunpack.c.l.b16 %v270
    %v634 = vunpack.c.h.b16 %v270
    %v635 = vunpack.c.l.b16 %v271
    %v636 = vunpack.c.h.b16 %v271
    %v637 = vunpack.c.l.b16 %v272
    %v638 = vunpack.c.h.b16 %v272
    %v639 = vunpack.c.l.b16 %v273
    %v640 = vunpack.c.h.b16 %v273
    %v641 = vunpack.c.l.b16 %v274
    %v642 = vunpack.c.h.b16 %v274
    %v643 = vunpack.c.l.b16 %v275
    %v644 = vunpack.c.h.b16 %v275
    %v645 = vunpack.c.l.b16 %v276
    %v646 = vunpack.c.h.b16 %v276
    %v647 = vunpack.c.l.b16 %v277
    %v648 = vunpack.c.h.b16 %v277
    %v649 = vunpack.c.l.b16 %v278
    %v650 = vunpack.c.h.b16 %v278
    %v651 = vunpack.c.l.b16 %v279
    %v652 = vunpack.c.h.b16 %v279
    %v653 = vunpack.c.l.b16 %v280
    %v654 = vunpack.c.h.b16 %v280
    %v655 = vunpack.c.l.b16 %v281
    %v656 = vunpack.c.h.b16 %v281
    %v657 = vunpack.c.l.b16 %v282
    %v658 = vunpack.c.h.b16 %v282
    %v659 = vunpack.c.l.b16 %v283
    %v660 = vunpack.c.h.b16 %v283
    %v661 = vunpack.c.l.b16 %v284
    %v662 = vunpack.c.h.b16 %v284
    %v663 = vunpack.c.l.b16 %v285
    %v664 = vunpack.c.h.b16 %v285
    %v665 = vunpack.c.l.b16 %v286
    %v666 = vunpack.c.h.b16 %v286
    %v667 = vunpack.c.l.b16 %v287
    %v668 = vunpack.c.h.b16 %v287
    %v669 = vunpack.c.l.b16 %v288
    %v670 = vunpack.c.h.b16 %v288
    %v671 = vunpack.c.l.b16 %v289
    %v672 = vunpack.c.h.b16 %v289
    %v673 = vunpack.c.l.b16 %v290
    %v674 = vunpack.c.h.b16 %v290
    %v675 = vunpack.c.l.b16 %v291
    %v676 = vunpack.c.h.b16 %v291
    %v677 = vunpack.c.l.b16 %v292
    %v678 = vunpack.c.h.b16 %v292
    %v679 = vunpack.c.l.b16 %v293
    %v680 = vunpack.c.h.b16 %v293
    %v681 = vunpack.c.l.b16 %v294
    %v682 = vunpack.c.h.b16 %v294
    %v683 = vunpack.c.l.b16 %v295
    %v684 = vunpack.c.h.b16 %v295
    %v685 = vunpack.c.l.b16 %v296
    %v686 = vunpack.c.h.b16 %v296
    %v687 = vunpack.c.l.b16 %v297
    %v688 = vunpack.c.h.b16 %v297
    %v689 = vunpack.c.l.b16 %v298
    %v690 = vunpack.c.h.b16 %v298
    %v691 = vunpack.c.l.b16 %v299
    %v692 = vunpack.c.h.b16 %v299
    %v693 = vunpack.c.l.b16 %v300
    %v694 = vunpack.c.h.b16 %v300
    %v695 = vunpack.c.l.b16 %v301
    %v696 = vunpack.c.h.b16 %v301
    %v697 = vunpack.c.l.b16 %v302
    %v698 = vunpack.c.h.b16 %v302
    %v699 = vpack.c.b16 %v445, %v443
    %v700 = vpack.c.b16 %v446, %v444
    %v701 = vpack.c.b16 %v449, %v447
    %v702 = vpack.c.b16 %v450, %v448
    %v703 = vpack.c.b16 %v453, %v451
    %v704 = vpack.c.b16 %v454, %v452
    %v705 = vpack.c.b16 %v457, %v455
    %v706 = vpack.c.b16 %v458, %v456
    %v707 = vpack.c.b16 %v461, %v459
    %v708 = vpack.c.b16 %v462, %v460
    %v709 = vpack.c.b16 %v465, %v463
    %v710 = vpack.c.b16 %v466, %v464
    %v711 = vpack.c.b16 %v469, %v467
    %v712 = vpack.c.b16 %v470, %v468
    %v713 = vpack.c.b16 %v473, %v471
    %v714 = vpack.c.b16 %v474, %v472
    %v715 = vpack.c.b16 %v477, %v475
    %v716 = vpack.c.b16 %v478, %v476
    %v717 = vpack.c.b16 %v481, %v479
    %v718 = vpack.c.b16 %v482, %v480
    %v719 = vpack.c.b16 %v485, %v483
    %v720 = vpack.c.b16 %v486, %v484
    %v721 = vpack.c.b16 %v489, %v487
    %v722 = vpack.c.b16 %v490, %v488
    %v723 = vpack.c.b16 %v493, %v491
    %v724 = vpack.c.b16 %v494, %v492
    %v725 = vpack.c.b16 %v497, %v495
    %v726 = vpack.c.b16 %v498, %v496
    %v727 = vpack.c.b16 %v501, %v499
    %v728 = vpack.c.b16 %v502, %v500
    %v729 = vpack.c.b16 %v505, %v503
    %v730 = vpack.c.b16 %v506, %v504
    %v731 = vpack.c.b16 %v509, %v507
    %v732 = vpack.c.b16 %v510, %v508
    %v733 = vpack.c.b16 %v513, %v511
    %v734 = vpack.c.b16 %v514, %v512
    %v735 = vpack.c.b16 %v517, %v515
    %v736 = vpack.c.b16 %v518, %v516
    %v737 = vpack.c.b16 %v521, %v519
    %v738 = vpack.c.b16 %v522, %v520
    %v739 = vpack.c.b16 %v525, %v523
    %v740 = vpack.c.b16 %v526, %v524
    %v741 = vpack.c.b16 %v529, %v527
    %v742 = vpack.c.b16 %v530, %v528
    %v743 = vpack.c.b16 %v533, %v531
    %v744 = vpack.c.b16 %v534, %v532
    %v745 = vpack.c.b16 %v537, %v535
    %v746 = vpack.c.b16 %v538, %v536
    %v747 = vpack.c.b16 %v541, %v539
    %v748 = vpack.c.b16 %v542, %v540
    %v749 = vpack.c.b16 %v545, %v543
    %v750 = vpack.c.b16 %v546, %v544
    %v751 = vpack.c.b16 %v549, %v547
    %v752 = vpack.c.b16 %v550, %v548
    %v753 = vpack.c.b16 %v553, %v551
    %v754 = vpack.c.b16 %v554, %v552
    %v755 = vpack.c.b16 %v557, %v555
    %v756 = vpack.c.b16 %v558, %v556
    %v757 = vpack.c.b16 %v561, %v559
    %v758 = vpack.c.b16 %v562, %v560
    %v759 = vpack.c.b16 %v565, %v563
    %v760 = vpack.c.b16 %v566, %v564
    %v761 = vpack.c.b16 %v569, %v567
    %v762 = vpack.c.b16 %v570, %v568
    %v763 = vpack.c.b16 %v573, %v571
    %v764 = vpack.c.b16 %v574, %v572
    %v765 = vpack.c.b16 %v577, %v575
    %v766 = vpack.c.b16 %v578, %v576
    %v767 = vpack.c.b16 %v581, %v579
    %v768 = vpack.c.b16 %v582, %v580
    %v769 = vpack.c.b16 %v585, %v583
    %v770 = vpack.c.b16 %v586, %v584
    %v771 = vpack.c.b16 %v589, %v587
    %v772 = vpack.c.b16 %v590, %v588
    %v773 = vpack.c.b16 %v593, %v591
    %v774 = vpack.c.b16 %v594, %v592
    %v775 = vpack.c.b16 %v597, %v595
    %v776 = vpack.c.b16 %v598, %v596
    %v777 = vpack.c.b16 %v601, %v599
    %v778 = vpack.c.b16 %v602, %v600
    %v779 = vpack.c.b16 %v605, %v603
    %v780 = vpack.c.b16 %v606, %v604
    %v781 = vpack.c.b16 %v609, %v607
    %v782 = vpack.c.b16 %v610, %v608
    %v783 = vpack.c.b16 %v613, %v611
    %v784 = vpack.c.b16 %v614, %v612
    %v785 = vpack.c.b16 %v617, %v615
    %v786 = vpack.c.b16 %v618, %v616
    %v787 = vpack.c.b16 %v621, %v619
    %v788 = vpack.c.b16 %v622, %v620
    %v789 = vpack.c.b16 %v625, %v623
    %v790 = vpack.c.b16 %v626, %v624
    %v791 = vpack.c.b16 %v629, %v627
    %v792 = vpack.c.b16 %v630, %v628
    %v793 = vpack.c.b16 %v633, %v631
    %v794 = vpack.c.b16 %v634, %v632
    %v795 = vpack.c.b16 %v637, %v635
    %v796 = vpack.c.b16 %v638, %v636
    %v797 = vpack.c.b16 %v641, %v639
    %v798 = vpack.c.b16 %v642, %v640
    %v799 = vpack.c.b16 %v645, %v643
    %v800 = vpack.c.b16 %v646, %v644
    %v801 = vpack.c.b16 %v649, %v647
    %v802 = vpack.c.b16 %v650, %v648
    %v803 = vpack.c.b16 %v653, %v651
    %v804 = vpack.c.b16 %v654, %v652
    %v805 = vpack.c.b16 %v657, %v655
    %v806 = vpack.c.b16 %v658, %v656
    %v807 = vpack.c.b16 %v661, %v659
    %v808 = vpack.c.b16 %v662, %v660
    %v809 = vpack.c.b16 %v665, %v663
    %v810 = vpack.c.b16 %v666, %v664
    %v811 = vpack.c.b16 %v669, %v667
    %v812 = vpack.c.b16 %v670, %v668
    %v813 = vpack.c.b16 %v673, %v671
    %v814 = vpack.c.b16 %v674, %v672
    %v815 = vpack.c.b16 %v677, %v675
    %v816 = vpack.c.b16 %v678, %v676
    %v817 = vpack.c.b16 %v681, %v679
    %v818 = vpack.c.b16 %v682, %v680
    %v819 = vpack.c.b16 %v685, %v683
    %v820 = vpack.c.b16 %v686, %v684
    %v821 = vpack.c.b16 %v689, %v687
    %v822 = vpack.c.b16 %v690, %v688
    %v823 = vpack.c.b16 %v693, %v691
    %v824 = vpack.c.b16 %v694, %v692
    %v825 = vpack.c.b16 %v697, %v695
    %v826 = vpack.c.b16 %v698, %v696
    %955 = vmatprep.subr.bf16.mxu0 %v714
    %956 = vmatpush1.bf16.msra.mxu0 %v713
    %957 = vmatprep.subr.bf16.mxu0 %v712
    %958 = vmatpush1.bf16.msra.mxu0 %v711
    %959 = vmatprep.subr.bf16.mxu0 %v710
    %960 = vmatpush1.bf16.msra.mxu0 %v709
    %961 = vmatprep.subr.bf16.mxu0 %v708
    %962 = vmatpush1.bf16.msra.mxu0 %v707
    %963 = vmatprep.subr.bf16.mxu0 %v706
    %964 = vmatpush1.bf16.msra.mxu0 %v705
    %965 = vmatprep.subr.bf16.mxu0 %v704
    %966 = vmatpush1.bf16.msra.mxu0 %v703
    %967 = vmatprep.subr.bf16.mxu0 %v702
    %968 = vmatpush1.bf16.msra.mxu0 %v701
    %969 = vmatprep.subr.bf16.mxu0 %v700
    %970 = vmatpush1.bf16.msra.mxu0 %v699
    %971 = vmatprep.subr.bf16.mxu0 %v730
    %972 = vmatpush2.bf16.msra.mxu0 %v729
    %973 = vmatprep.subr.bf16.mxu0 %v728
    %974 = vmatpush2.bf16.msra.mxu0 %v727
    %975 = vmatprep.subr.bf16.mxu0 %v726
    %976 = vmatpush2.bf16.msra.mxu0 %v725
    %977 = vmatprep.subr.bf16.mxu0 %v724
    %978 = vmatpush2.bf16.msra.mxu0 %v723
    %979 = vmatprep.subr.bf16.mxu0 %v722
    %980 = vmatpush2.bf16.msra.mxu0 %v721
    %981 = vmatprep.subr.bf16.mxu0 %v720
    %982 = vmatpush2.bf16.msra.mxu0 %v719
    %983 = vmatprep.subr.bf16.mxu0 %v718
    %984 = vmatpush2.bf16.msra.mxu0 %v717
    %985 = vmatprep.subr.bf16.mxu0 %v716
    %986 = vmatpush2.bf16.msra.mxu0 %v715
    %987 = vmatprep.mubr.bf16.mxu0 %v168
    %988 = vmatmul.mubr.bf16.gmra.mxu0 %v167
    %v989 = vpop.f32.mrf.mxu0
    %v990 = vadd.f32 %v308, %v989
    %v991 = vpop.f32.mrf.mxu0
    %v992 = vadd.f32 %v312, %v991
    %v993 = vpop.f32.mrf.mxu0
    %v994 = vpop.f32.mrf.mxu0
    %995 = vdwg.mxu0
    %996 = vmatprep.subr.bf16.mxu0 %v746
    %997 = vmatpush1.bf16.msra.mxu0 %v745
    %998 = vmatprep.subr.bf16.mxu0 %v744
    %999 = vmatpush1.bf16.msra.mxu0 %v743
    %1000 = vmatprep.subr.bf16.mxu0 %v742
    %1001 = vmatpush1.bf16.msra.mxu0 %v741
    %1002 = vmatprep.subr.bf16.mxu0 %v740
    %1003 = vmatpush1.bf16.msra.mxu0 %v739
    %1004 = vmatprep.subr.bf16.mxu0 %v738
    %1005 = vmatpush1.bf16.msra.mxu0 %v737
    %1006 = vmatprep.subr.bf16.mxu0 %v736
    %1007 = vmatpush1.bf16.msra.mxu0 %v735
    %1008 = vmatprep.subr.bf16.mxu0 %v734
    %1009 = vmatpush1.bf16.msra.mxu0 %v733
    %1010 = vmatprep.subr.bf16.mxu0 %v732
    %1011 = vmatpush1.bf16.msra.mxu0 %v731
    %1012 = vmatprep.subr.bf16.mxu0 %v762
    %1013 = vmatpush2.bf16.msra.mxu0 %v761
    %1014 = vmatprep.subr.bf16.mxu0 %v760
    %1015 = vmatpush2.bf16.msra.mxu0 %v759
    %1016 = vmatprep.subr.bf16.mxu0 %v758
    %1017 = vmatpush2.bf16.msra.mxu0 %v757
    %1018 = vmatprep.subr.bf16.mxu0 %v756
    %1019 = vmatpush2.bf16.msra.mxu0 %v755
    %1020 = vmatprep.subr.bf16.mxu0 %v754
    %1021 = vmatpush2.bf16.msra.mxu0 %v753
    %1022 = vmatprep.subr.bf16.mxu0 %v752
    %1023 = vmatpush2.bf16.msra.mxu0 %v751
    %1024 = vmatprep.subr.bf16.mxu0 %v750
    %1025 = vmatpush2.bf16.msra.mxu0 %v749
    %1026 = vmatprep.subr.bf16.mxu0 %v748
    %1027 = vmatpush2.bf16.msra.mxu0 %v747
    %1028 = vmatprep.mubr.bf16.mxu0 %v170
    %1029 = vmatmul.mubr.bf16.gmra.mxu0 %v169
    %v1030 = vpop.f32.mrf.mxu0
    %v1031 = vadd.f32 %v990, %v1030
    %v1032 = vpop.f32.mrf.mxu0
    %v1033 = vadd.f32 %v992, %v1032
    %v1034 = vpop.f32.mrf.mxu0
    %v1035 = vpop.f32.mrf.mxu0
    %1036 = vdwg.mxu0
    %1037 = vmatprep.subr.bf16.mxu0 %v778
    %1038 = vmatpush1.bf16.msra.mxu0 %v777
    %1039 = vmatprep.subr.bf16.mxu0 %v776
    %1040 = vmatpush1.bf16.msra.mxu0 %v775
    %1041 = vmatprep.subr.bf16.mxu0 %v774
    %1042 = vmatpush1.bf16.msra.mxu0 %v773
    %1043 = vmatprep.subr.bf16.mxu0 %v772
    %1044 = vmatpush1.bf16.msra.mxu0 %v771
    %1045 = vmatprep.subr.bf16.mxu0 %v770
    %1046 = vmatpush1.bf16.msra.mxu0 %v769
    %1047 = vmatprep.subr.bf16.mxu0 %v768
    %1048 = vmatpush1.bf16.msra.mxu0 %v767
    %1049 = vmatprep.subr.bf16.mxu0 %v766
    %1050 = vmatpush1.bf16.msra.mxu0 %v765
    %1051 = vmatprep.subr.bf16.mxu0 %v764
    %1052 = vmatpush1.bf16.msra.mxu0 %v763
    %1053 = vmatprep.subr.bf16.mxu0 %v794
    %1054 = vmatpush2.bf16.msra.mxu0 %v793
    %1055 = vmatprep.subr.bf16.mxu0 %v792
    %1056 = vmatpush2.bf16.msra.mxu0 %v791
    %1057 = vmatprep.subr.bf16.mxu0 %v790
    %1058 = vmatpush2.bf16.msra.mxu0 %v789
    %1059 = vmatprep.subr.bf16.mxu0 %v788
    %1060 = vmatpush2.bf16.msra.mxu0 %v787
    %1061 = vmatprep.subr.bf16.mxu0 %v786
    %1062 = vmatpush2.bf16.msra.mxu0 %v785
    %1063 = vmatprep.subr.bf16.mxu0 %v784
    %1064 = vmatpush2.bf16.msra.mxu0 %v783
    %1065 = vmatprep.subr.bf16.mxu0 %v782
    %1066 = vmatpush2.bf16.msra.mxu0 %v781
    %1067 = vmatprep.subr.bf16.mxu0 %v780
    %1068 = vmatpush2.bf16.msra.mxu0 %v779
    %1069 = vmatprep.mubr.bf16.mxu0 %v172
    %1070 = vmatmul.mubr.bf16.gmra.mxu0 %v171
    %v1071 = vpop.f32.mrf.mxu0
    %v1072 = vadd.f32 %v1031, %v1071
    %v1073 = vpop.f32.mrf.mxu0
    %v1074 = vadd.f32 %v1033, %v1073
    %v1075 = vpop.f32.mrf.mxu0
    %v1076 = vpop.f32.mrf.mxu0
    %1077 = vdwg.mxu0
    %1078 = vmatprep.subr.bf16.mxu0 %v810
    %1079 = vmatpush1.bf16.msra.mxu0 %v809
    %1080 = vmatprep.subr.bf16.mxu0 %v808
    %1081 = vmatpush1.bf16.msra.mxu0 %v807
    %1082 = vmatprep.subr.bf16.mxu0 %v806
    %1083 = vmatpush1.bf16.msra.mxu0 %v805
    %1084 = vmatprep.subr.bf16.mxu0 %v804
    %1085 = vmatpush1.bf16.msra.mxu0 %v803
    %1086 = vmatprep.subr.bf16.mxu0 %v802
    %1087 = vmatpush1.bf16.msra.mxu0 %v801
    %1088 = vmatprep.subr.bf16.mxu0 %v800
    %1089 = vmatpush1.bf16.msra.mxu0 %v799
    %1090 = vmatprep.subr.bf16.mxu0 %v798
    %1091 = vmatpush1.bf16.msra.mxu0 %v797
    %1092 = vmatprep.subr.bf16.mxu0 %v796
    %1093 = vmatpush1.bf16.msra.mxu0 %v795
    %1094 = vmatprep.subr.bf16.mxu0 %v826
    %1095 = vmatpush2.bf16.msra.mxu0 %v825
    %1096 = vmatprep.subr.bf16.mxu0 %v824
    %1097 = vmatpush2.bf16.msra.mxu0 %v823
    %1098 = vmatprep.subr.bf16.mxu0 %v822
    %1099 = vmatpush2.bf16.msra.mxu0 %v821
    %1100 = vmatprep.subr.bf16.mxu0 %v820
    %1101 = vmatpush2.bf16.msra.mxu0 %v819
    %1102 = vmatprep.subr.bf16.mxu0 %v818
    %1103 = vmatpush2.bf16.msra.mxu0 %v817
    %1104 = vmatprep.subr.bf16.mxu0 %v816
    %1105 = vmatpush2.bf16.msra.mxu0 %v815
    %1106 = vmatprep.subr.bf16.mxu0 %v814
    %1107 = vmatpush2.bf16.msra.mxu0 %v813
    %1108 = vmatprep.subr.bf16.mxu0 %v812
    %1109 = vmatpush2.bf16.msra.mxu0 %v811
    %1110 = vmatprep.mubr.bf16.mxu0 %v174
    %1111 = vmatmul.mubr.bf16.gmra.mxu0 %v173
    %v1112 = vpop.f32.mrf.mxu0
    %v1113 = vadd.f32 %v1072, %v1112
    %v1114 = vpop.f32.mrf.mxu0
    %v1115 = vadd.f32 %v1074, %v1114
    %v1116 = vpop.f32.mrf.mxu0
    %v1117 = vpop.f32.mrf.mxu0
    %1118 = vdwg.mxu0
    %v1119 = vmax.f32 %v1113, 0.0
    %v1120 = vmax.f32 %v1115, 0.0
    %v1121 = vpack.c.bf16 %v1119, %v1119
    %v1122 = vpack.c.bf16 %v1120, %v1120
    %v1123 = vld [vmem:[#allocation7] sm:$0xf]
    %v1124 = vld [vmem:[#allocation7 + $0x4] sm:$0xf]
    %v1125 = vld [vmem:[#allocation7 + $0x8] sm:$0xf]
    %v1126 = vld [vmem:[#allocation7 + $0xc] sm:$0xf]
    %v1127 = vld [vmem:[#allocation7 + $0x10] sm:$0xf]
    %v1128 = vld [vmem:[#allocation7 + $0x14] sm:$0xf]
    %v1129 = vld [vmem:[#allocation7 + $0x18] sm:$0xf]
    %v1130 = vld [vmem:[#allocation7 + $0x1c] sm:$0xf]
    %v1131 = vld [vmem:[#allocation7 + $0x20] sm:$0xf]
    %v1132 = vld [vmem:[#allocation7 + $0x24] sm:$0xf]
    %v1133 = vld [vmem:[#allocation7 + $0x28] sm:$0xf]
    %v1134 = vld [vmem:[#allocation7 + $0x2c] sm:$0xf]
    %v1135 = vld [vmem:[#allocation7 + $0x30] sm:$0xf]
    %v1136 = vld [vmem:[#allocation7 + $0x34] sm:$0xf]
    %v1137 = vld [vmem:[#allocation7 + $0x38] sm:$0xf]
    %v1138 = vld [vmem:[#allocation7 + $0x3c] sm:$0xf]
    %v1139 = vld [vmem:[#allocation7 + $0x40] sm:$0xf]
    %v1140 = vld [vmem:[#allocation7 + $0x44] sm:$0xf]
    %v1141 = vld [vmem:[#allocation7 + $0x48] sm:$0xf]
    %v1142 = vld [vmem:[#allocation7 + $0x4c] sm:$0xf]
    %v1143 = vld [vmem:[#allocation7 + $0x50] sm:$0xf]
    %v1144 = vld [vmem:[#allocation7 + $0x54] sm:$0xf]
    %v1145 = vld [vmem:[#allocation7 + $0x58] sm:$0xf]
    %v1146 = vld [vmem:[#allocation7 + $0x5c] sm:$0xf]
    %v1147 = vld [vmem:[#allocation7 + $0x60] sm:$0xf]
    %v1148 = vld [vmem:[#allocation7 + $0x64] sm:$0xf]
    %v1149 = vld [vmem:[#allocation7 + $0x68] sm:$0xf]
    %v1150 = vld [vmem:[#allocation7 + $0x6c] sm:$0xf]
    %v1151 = vld [vmem:[#allocation7 + $0x70] sm:$0xf]
    %v1152 = vld [vmem:[#allocation7 + $0x74] sm:$0xf]
    %v1153 = vld [vmem:[#allocation7 + $0x78] sm:$0xf]
    %v1154 = vld [vmem:[#allocation7 + $0x7c] sm:$0xf]
    %v1155 = vld [vmem:[%s4] sm:$0x1]
    %v1157 = vlaneseq
    %v1158 = vshrl.u32 %v1157, 7
    %v1159 = vsub.s32 0, %v1158
    %v1160 = vrot.slane %v1155, %v1159
    %v1194 = vunpack.c.l.b16 %v1123
    %v1195 = vunpack.c.l.b16 %v1124
    %v1196 = vunpack.c.l.b16 %v1125
    %v1197 = vunpack.c.l.b16 %v1126
    %v1198 = vunpack.c.l.b16 %v1127
    %v1199 = vunpack.c.l.b16 %v1128
    %v1200 = vunpack.c.l.b16 %v1129
    %v1201 = vunpack.c.l.b16 %v1130
    %v1202 = vunpack.c.l.b16 %v1131
    %v1203 = vunpack.c.l.b16 %v1132
    %v1204 = vunpack.c.l.b16 %v1133
    %v1205 = vunpack.c.l.b16 %v1134
    %v1206 = vunpack.c.l.b16 %v1135
    %v1207 = vunpack.c.l.b16 %v1136
    %v1208 = vunpack.c.l.b16 %v1137
    %v1209 = vunpack.c.l.b16 %v1138
    %v1210 = vunpack.c.l.b16 %v1139
    %v1211 = vunpack.c.l.b16 %v1140
    %v1212 = vunpack.c.l.b16 %v1141
    %v1213 = vunpack.c.l.b16 %v1142
    %v1214 = vunpack.c.l.b16 %v1143
    %v1215 = vunpack.c.l.b16 %v1144
    %v1216 = vunpack.c.l.b16 %v1145
    %v1217 = vunpack.c.l.b16 %v1146
    %v1218 = vunpack.c.l.b16 %v1147
    %v1219 = vunpack.c.l.b16 %v1148
    %v1220 = vunpack.c.l.b16 %v1149
    %v1221 = vunpack.c.l.b16 %v1150
    %v1222 = vunpack.c.l.b16 %v1151
    %v1223 = vunpack.c.l.b16 %v1152
    %v1224 = vunpack.c.l.b16 %v1153
    %v1225 = vunpack.c.l.b16 %v1154
    %v1226 = vpack.c.b16 %v1195, %v1194
    %v1227 = vpack.c.b16 %v1197, %v1196
    %v1228 = vpack.c.b16 %v1199, %v1198
    %v1229 = vpack.c.b16 %v1201, %v1200
    %v1230 = vpack.c.b16 %v1203, %v1202
    %v1231 = vpack.c.b16 %v1205, %v1204
    %v1232 = vpack.c.b16 %v1207, %v1206
    %v1233 = vpack.c.b16 %v1209, %v1208
    %v1234 = vpack.c.b16 %v1211, %v1210
    %v1235 = vpack.c.b16 %v1213, %v1212
    %v1236 = vpack.c.b16 %v1215, %v1214
    %v1237 = vpack.c.b16 %v1217, %v1216
    %v1238 = vpack.c.b16 %v1219, %v1218
    %v1239 = vpack.c.b16 %v1221, %v1220
    %v1240 = vpack.c.b16 %v1223, %v1222
    %v1241 = vpack.c.b16 %v1225, %v1224
    %1258 = vmatprep.subr.bf16.mxu0 0
    %1259 = vmatpush1.bf16.msra.mxu0 %v1233
    %1260 = vmatprep.subr.bf16.mxu0 0
    %1261 = vmatpush1.bf16.msra.mxu0 %v1232
    %1262 = vmatprep.subr.bf16.mxu0 0
    %1263 = vmatpush1.bf16.msra.mxu0 %v1231
    %1264 = vmatprep.subr.bf16.mxu0 0
    %1265 = vmatpush1.bf16.msra.mxu0 %v1230
    %1266 = vmatprep.subr.bf16.mxu0 0
    %1267 = vmatpush1.bf16.msra.mxu0 %v1229
    %1268 = vmatprep.subr.bf16.mxu0 0
    %1269 = vmatpush1.bf16.msra.mxu0 %v1228
    %1270 = vmatprep.subr.bf16.mxu0 0
    %1271 = vmatpush1.bf16.msra.mxu0 %v1227
    %1272 = vmatprep.subr.bf16.mxu0 0
    %1273 = vmatpush1.bf16.msra.mxu0 %v1226
    %1274 = vmatprep.subr.bf16.mxu0 0
    %1275 = vmatpush2.bf16.msra.mxu0 %v1241
    %1276 = vmatprep.subr.bf16.mxu0 0
    %1277 = vmatpush2.bf16.msra.mxu0 %v1240
    %1278 = vmatprep.subr.bf16.mxu0 0
    %1279 = vmatpush2.bf16.msra.mxu0 %v1239
    %1280 = vmatprep.subr.bf16.mxu0 0
    %1281 = vmatpush2.bf16.msra.mxu0 %v1238
    %1282 = vmatprep.subr.bf16.mxu0 0
    %1283 = vmatpush2.bf16.msra.mxu0 %v1237
    %1284 = vmatprep.subr.bf16.mxu0 0
    %1285 = vmatpush2.bf16.msra.mxu0 %v1236
    %1286 = vmatprep.subr.bf16.mxu0 0
    %1287 = vmatpush2.bf16.msra.mxu0 %v1235
    %1288 = vmatprep.subr.bf16.mxu0 0
    %1289 = vmatpush2.bf16.msra.mxu0 %v1234
    %1290 = vmatprep.mubr.bf16.mxu0 %v1122
    %1291 = vmatmul.mubr.bf16.gmra.mxu0 %v1121
    %v1292 = vpop.f32.mrf.mxu0
    %v1293 = vadd.f32 %v1160, %v1292
    %v1294 = vpop.f32.mrf.mxu0
    %v1295 = vpop.f32.mrf.mxu0
    %v1296 = vpop.f32.mrf.mxu0
    %1297 = vdwg.mxu0
    %1298 = vst [vmem:[#allocation8] sm:$0xff] %v1293
    // Predicated region
    $region34: #{tpu_custom_call.1} parent=1 // pred_check
      _
    $region35: #{tpu_custom_call.1} parent=1 // pred_check_branch
      %1300 = sbr.rel (0) target = $region37
    $region36: #{tpu_custom_call.1} parent=1 // pred_region
      %s1302 = ssub.s32 128, 32
      %1303 = vsyncadd [#allocation4], %s1302
      %s1304 = sshll.u32 [#allocation8], 4
      %s1305 = int_to_ptr.vmem [resolvable:$true] %s1304
      %1310 = dma.vmem_to_hbm [thread:$0]  %s1305, 32, %s5, [#allocation4], 32, 32, 2
    $region37: #{tpu_custom_call.1} parent=1 // pred_fallthru
      _
    // Predicated region
    $region38: #{tpu_custom_call.1} parent=1 // pred_check
      _
    $region39: #{tpu_custom_call.1} parent=1 // pred_check_branch
      %1312 = sbr.rel (0) target = $region41
    $region40: #{tpu_custom_call.1} parent=1 // pred_region
      %1313 = dma.done [#allocation4], 128
    $region41: #{tpu_custom_call.1} parent=1 // pred_fallthru
      _
    %1314 = vsyncpa [#allocation3], 1
    %1315 = vsyncpa [#allocation6], 1
    %1316 = vsyncpa [#allocation4], 1

</llo_original>
